<compile_context>
chip_gen: v5e
topology: v5e:2x2
jax: 0.10.0
libtpu: 0.0.40
codegen_flags: <defaults>
</compile_context>

<pallas_src>
import functools

import numpy as np
import jax
import jax.numpy as jnp
from jax import lax
from jax.experimental import pallas as pl
from jax.experimental.pallas import tpu as pltpu


# ----------------------------------------------------------------------------
# Kernel
# ----------------------------------------------------------------------------
def _make_kernel(H, W, Cin, Cup, Cskip, Cout, Th, compute_dtype):
    Ho, Wo = 2 * H, 2 * W
    half = Th // 2 + 1  # number of even (and of odd) upsampled rows needed

    def kernel(x1_ref, x2_ref, wue_ref, wuo_ref, bup_ref,
               wcu_ref, wcx_ref, bc_ref, o_ref):
        t = pl.program_id(1)
        q = t * (Th // 2)      # first x1 row feeding this tile
        r0 = t * Th            # first output row of this tile

        # ---- ConvTranspose2d(k3,s2,p1,op1) + ReLU, parity-decomposed --------
        # x1_ref rows are x1 padded with one zero row on top/bottom, so x1 row
        # `a` lives at padded row a+1.
        rows_a = x1_ref[0, pl.ds(q, half), :]        # x1 rows q-1 .. (shift 0)
        rows_a1 = x1_ref[0, pl.ds(q + 1, half), :]   # x1 rows q   .. (shift 1)
        a_even = rows_a1                              # even out rows: 1 input row
        a_odd = jnp.concatenate([rows_a, rows_a1], axis=-1)  # odd rows: 2 rows
        u_e = jnp.dot(a_even, wue_ref[...],
                      preferred_element_type=jnp.float32) + bup_ref[...]
        u_o = jnp.dot(a_odd, wuo_ref[...],
                      preferred_element_type=jnp.float32) + bup_ref[...]
        u_e = jnp.maximum(u_e, 0.0)
        u_o = jnp.maximum(u_o, 0.0)

        # Interleave odd/even upsampled rows -> rows [r0-1, r0+Th] of `up`
        # (the +/-1 rows are the 3x3-conv halo).
        up = jnp.concatenate([u_o[:, None, :], u_e[:, None, :]], axis=1)
        up = up.reshape(Th + 2, Wo * Cup)
        zc = jnp.zeros((Th + 2, Cup), jnp.float32)
        up_p = jnp.concatenate([zc, up, zc], axis=-1)      # width halo (zeros)
        # Rows falling outside the image (top of first / bottom of last tile)
        # are the conv's zero padding, not transposed-conv values -> mask them.
        j = lax.broadcasted_iota(jnp.int32, (Th + 2, 1), 0)
        g = r0 - 1 + j
        up_p = jnp.where(jnp.logical_and(g >= 0, g < Ho), up_p, 0.0)
        up_p = up_p.astype(compute_dtype)

        # ---- fused Conv2d(3x3, pad=1) + ReLU over concat([up, x2]) ----------
        # Channel concat never materialized: conv weight is split into the
        # up-channel part and the skip-channel part.
        a_up = jnp.concatenate([up_p[kh:kh + Th, :] for kh in range(3)],
                               axis=-1)
        a_x2 = jnp.concatenate(
            [x2_ref[0, pl.ds(r0 + kh, Th), :] for kh in range(3)], axis=-1)
        y = (jnp.dot(a_up, wcu_ref[...], preferred_element_type=jnp.float32)
             + jnp.dot(a_x2, wcx_ref[...], preferred_element_type=jnp.float32)
             + bc_ref[...])
        y = jnp.maximum(y, 0.0)                    # (Th, Wo*Cout) lane-dense
        o_ref[...] = y[None].astype(o_ref.dtype)

    return kernel


# ----------------------------------------------------------------------------
# Toeplitz selector matrices (pure index logic, built with numpy at trace time)
# ----------------------------------------------------------------------------
def _toeplitz_selectors(W, Wo):
    # transposed conv: ow = 2*iw - 1 + kw
    s_up = np.zeros((W + 1, 3, Wo), np.float32)
    for iw in range(W + 1):
        for kw in range(3):
            ow = 2 * iw - 1 + kw
            if 0 <= ow < Wo:
                s_up[iw, kw, ow] = 1.0
    # 3x3 conv, pad=1: padded col wp = ow + kw
    s_c = np.zeros((Wo + 2, 3, Wo), np.float32)
    for ow in range(Wo):
        for kw in range(3):
            s_c[ow + kw, kw, ow] = 1.0
    return s_up, s_c


# ----------------------------------------------------------------------------
# Forward wrapper (bn=False path of TernausUp)
# ----------------------------------------------------------------------------
@functools.partial(jax.jit, static_argnames=("row_tile", "compute_dtype"))
def ternaus_up_forward(x1_nchw, x2_nchw, params, *, row_tile=None,
                       compute_dtype=jnp.float32):
    N, Cin, H, W = x1_nchw.shape
    _, Cskip, Ho, Wo = x2_nchw.shape
    assert Ho == 2 * H and Wo == 2 * W
    Cup = params["w_up_t"].shape[1]
    Cout = params["w_conv"].shape[0]
    assert params["w_conv"].shape[1] == Cup + Cskip

    # ---- row tile (even; multiple of 8 or full height, per BlockSpec rules) --
    if row_tile is None:
        row_tile = Ho
        for cand in (64, 32, 16, 8):
            if Ho % cand == 0:
                row_tile = cand
                break
    Th = int(row_tile)
    assert Ho % Th == 0 and Th % 2 == 0 and (Th % 8 == 0 or Th == Ho)
    nt = Ho // Th

    f32 = jnp.float32
    cdt = compute_dtype

    # ---- activations: NCHW -> NHWC, pad, flatten (w, c) onto the lane axis ---
    x1 = jnp.transpose(x1_nchw, (0, 2, 3, 1))
    x2 = jnp.transpose(x2_nchw, (0, 2, 3, 1))
    x1p = jnp.pad(x1, ((0, 0), (1, 1), (0, 1), (0, 0)))       # row/col zeros
    x1p = x1p.reshape(N, H + 2, (W + 1) * Cin).astype(cdt)
    x2p = jnp.pad(x2, ((0, 0), (1, 1), (1, 1), (0, 0)))       # conv halo zeros
    x2p = x2p.reshape(N, Ho + 2, (Wo + 2) * Cskip).astype(cdt)

    # ---- Toeplitz-expanded weights (built once per call, stay VMEM-resident) -
    s_up, s_c = _toeplitz_selectors(W, Wo)
    wt = jnp.transpose(params["w_up_t"], (2, 3, 0, 1)).astype(f32)  # (kh,kw,ci,co)
    wc = jnp.transpose(params["w_conv"], (2, 3, 1, 0)).astype(f32)  # (kh,kw,cc,co)

    w_ue = jnp.einsum("iko,kcd->icod", s_up, wt[1])
    w_ue = w_ue.reshape((W + 1) * Cin, Wo * Cup)
    t_odd = jnp.stack([wt[2], wt[0]], axis=0)                 # (row-shift, kw, ci, co)
    w_uo = jnp.einsum("iko,rkcd->ricod", s_up, t_odd)
    w_uo = w_uo.reshape(2 * (W + 1) * Cin, Wo * Cup)
    w_cu = jnp.einsum("pko,hkcd->hpcod", s_c, wc[:, :, :Cup, :])
    w_cu = w_cu.reshape(3 * (Wo + 2) * Cup, Wo * Cout)
    w_cx = jnp.einsum("pko,hkcd->hpcod", s_c, wc[:, :, Cup:, :])
    w_cx = w_cx.reshape(3 * (Wo + 2) * Cskip, Wo * Cout)
    w_ue, w_uo, w_cu, w_cx = (a.astype(cdt) for a in (w_ue, w_uo, w_cu, w_cx))

    b_up = jnp.tile(params["b_up"].astype(f32), Wo).reshape(1, Wo * Cup)
    b_c = jnp.tile(params["b_conv"].astype(f32), Wo).reshape(1, Wo * Cout)

    kernel = _make_kernel(H, W, Cin, Cup, Cskip, Cout, Th, cdt)

    out = pl.pallas_call(
        kernel,
        out_shape=jax.ShapeDtypeStruct((N, Ho, Wo * Cout), f32),
        grid=(N, nt),
        in_specs=[
            pl.BlockSpec((1, H + 2, (W + 1) * Cin), lambda n, t: (n, 0, 0)),
            pl.BlockSpec((1, Ho + 2, (Wo + 2) * Cskip), lambda n, t: (n, 0, 0)),
            pl.BlockSpec(((W + 1) * Cin, Wo * Cup), lambda n, t: (0, 0)),
            pl.BlockSpec((2 * (W + 1) * Cin, Wo * Cup), lambda n, t: (0, 0)),
            pl.BlockSpec((1, Wo * Cup), lambda n, t: (0, 0)),
            pl.BlockSpec((3 * (Wo + 2) * Cup, Wo * Cout), lambda n, t: (0, 0)),
            pl.BlockSpec((3 * (Wo + 2) * Cskip, Wo * Cout), lambda n, t: (0, 0)),
            pl.BlockSpec((1, Wo * Cout), lambda n, t: (0, 0)),
        ],
        out_specs=pl.BlockSpec((1, Th, Wo * Cout), lambda n, t: (n, t, 0)),
        compiler_params=pltpu.CompilerParams(
            dimension_semantics=("parallel", "parallel"),
            vmem_limit_bytes=32 * 1024 * 1024,
        ),
    )(x1p, x2p, w_ue, w_uo, b_up, w_cu, w_cx, b_c)

    y = out.reshape(N, Ho, Wo, Cout)          # free: same row-major bytes
    return jnp.transpose(y, (0, 3, 1, 2))     # back to NCHW


# ----------------------------------------------------------------------------
# Parameters (PyTorch-native layouts) and pure-JAX reference
# ----------------------------------------------------------------------------
def init_params(key, in_channels, in_up_channels, skip_conn_channels,
                out_channels):
    k1, k2, k3, k4 = jax.random.split(key, 4)
    # nn.ConvTranspose2d weight: (Cin, Cup, 3, 3)
    w_up_t = jax.random.normal(
        k1, (in_channels, in_up_channels, 3, 3), jnp.float32) * 0.1
    b_up = jax.random.normal(k2, (in_up_channels,), jnp.float32) * 0.1
    cin_cat = in_up_channels + skip_conn_channels
    # nn.Conv2d weight: (Cout, Cin_cat, 3, 3)
    w_conv = jax.random.normal(
        k3, (out_channels, cin_cat, 3, 3), jnp.float32) * 0.1
    b_conv = jax.random.normal(k4, (out_channels,), jnp.float32) * 0.1
    return {"w_up_t": w_up_t, "b_up": b_up, "w_conv": w_conv, "b_conv": b_conv}


def reference_forward(x1_nchw, x2_nchw, params):
    """Pure-JAX reference (same math as the PyTorch module, bn=False path)."""
    x1 = jnp.transpose(x1_nchw, (0, 2, 3, 1))
    x2 = jnp.transpose(x2_nchw, (0, 2, 3, 1))
    dn = ("NHWC", "HWIO", "NHWC")
    w_up = jnp.transpose(jnp.flip(params["w_up_t"], axis=(2, 3)), (2, 3, 0, 1))
    up = lax.conv_general_dilated(
        x1, w_up, window_strides=(1, 1), padding=((1, 2), (1, 2)),
        lhs_dilation=(2, 2), dimension_numbers=dn)
    up = jnp.maximum(up + params["b_up"], 0.0)
    cat = jnp.concatenate([up, x2], axis=-1)
    w_c = jnp.transpose(params["w_conv"], (2, 3, 1, 0))
    y = lax.conv_general_dilated(
        cat, w_c, window_strides=(1, 1), padding=((1, 1), (1, 1)),
        dimension_numbers=dn)
    y = jnp.maximum(y + params["b_conv"], 0.0)
    return jnp.transpose(y, (0, 3, 1, 2))


if __name__ == "__main__":
    # TernausUp(in_channels=8, in_up_channels=4, skip_conn_channels=4,
    #           out_channels=8, bn=False)
    N, C_IN, C_UP, C_SKIP, C_OUT = 2, 8, 4, 4, 8
    H = W = 8   # x1 spatial; x2 / output are at (2H, 2W) = (16, 16)

    key = jax.random.PRNGKey(0)
    kx1, kx2, kp = jax.random.split(key, 3)
    x1 = jax.random.normal(kx1, (N, C_IN, H, W), jnp.float32)
    x2 = jax.random.normal(kx2, (N, C_SKIP, 2 * H, 2 * W), jnp.float32)
    params = init_params(kp, C_IN, C_UP, C_SKIP, C_OUT)

    ref = jax.block_until_ready(reference_forward(x1, x2, params))

    # f32 path, 2 row tiles per image -> grid (2, 2), both axes parallel.
    out = jax.block_until_ready(
        ternaus_up_forward(x1, x2, params, row_tile=8,
                           compute_dtype=jnp.float32))
    assert out.shape == (N, C_OUT, 2 * H, 2 * W), out.shape
    assert jnp.allclose(out, ref, atol=2e-4, rtol=2e-4), \
        float(jnp.max(jnp.abs(out - ref)))

    # bf16 compute path (v5e/v6e bandwidth optimization), looser tolerance.
    out_bf16 = jax.block_until_ready(
        ternaus_up_forward(x1, x2, params, row_tile=16,
                           compute_dtype=jnp.bfloat16))
    assert float(jnp.max(jnp.abs(out_bf16 - ref))) < 0.1

    # TODO(synk): the bn=True branch (BatchNorm2d after each conv) is not
    # implemented; only the default bn=False path is exercised here.
    print("KERNEL_OK")
</pallas_src>

<mosaic_0001>
module attributes {stable_mosaic.version = 11 : i64} {
  func.func @kernel(%arg0: i32, %arg1: i32, %arg2: memref<1x10x72xf32, #tpu.memory_space<vmem>>, %arg3: memref<1x18x72xf32, #tpu.memory_space<vmem>>, %arg4: memref<72x64xf32, #tpu.memory_space<vmem>>, %arg5: memref<144x64xf32, #tpu.memory_space<vmem>>, %arg6: memref<1x64xf32, #tpu.memory_space<vmem>>, %arg7: memref<216x128xf32, #tpu.memory_space<vmem>>, %arg8: memref<216x128xf32, #tpu.memory_space<vmem>>, %arg9: memref<1x128xf32, #tpu.memory_space<vmem>>, %arg10: memref<1x8x128xf32, #tpu.memory_space<vmem>>) attributes {dimension_semantics = [#tpu.dimension_semantics<parallel>, #tpu.dimension_semantics<parallel>], iteration_bounds = array<i64: 2, 2>, scalar_prefetch = 0 : i64, scratch_operands = 0 : i64, tpu.core_type = #tpu.core_type<tc>, window_params = [{transform_indices = @transform_0, window_bounds = array<i64: 1, 10, 72>}, {transform_indices = @transform_1, window_bounds = array<i64: 1, 18, 72>}, {pipeline_mode = #tpu.pipeline_mode<synchronous>, transform_indices = @transform_2, window_bounds = array<i64: 72, 64>}, {pipeline_mode = #tpu.pipeline_mode<synchronous>, transform_indices = @transform_3, window_bounds = array<i64: 144, 64>}, {pipeline_mode = #tpu.pipeline_mode<synchronous>, transform_indices = @transform_4, window_bounds = array<i64: 1, 64>}, {pipeline_mode = #tpu.pipeline_mode<synchronous>, transform_indices = @transform_5, window_bounds = array<i64: 216, 128>}, {pipeline_mode = #tpu.pipeline_mode<synchronous>, transform_indices = @transform_6, window_bounds = array<i64: 216, 128>}, {pipeline_mode = #tpu.pipeline_mode<synchronous>, transform_indices = @transform_7, window_bounds = array<i64: 1, 128>}, {transform_indices = @transform_8, window_bounds = array<i64: 1, 8, 128>}]} {
    %c4_i32 = arith.constant 4 : i32
    %0 = arith.muli %arg1, %c4_i32 : i32
    %c8_i32 = arith.constant 8 : i32
    %1 = arith.muli %arg1, %c8_i32 : i32
    %c0 = arith.constant 0 : index
    %2 = arith.index_cast %0 : i32 to index
    %c0_0 = arith.constant 0 : index
    %3 = vector.load %arg2[%c0, %2, %c0_0] : memref<1x10x72xf32, #tpu.memory_space<vmem>>, vector<1x5x72xf32>
    %4 = vector.shape_cast %3 : vector<1x5x72xf32> to vector<5x72xf32>
    %c1_i32 = arith.constant 1 : i32
    %5 = arith.addi %0, %c1_i32 : i32
    %c0_1 = arith.constant 0 : index
    %6 = arith.index_cast %5 : i32 to index
    %c0_2 = arith.constant 0 : index
    %7 = vector.load %arg2[%c0_1, %6, %c0_2] : memref<1x10x72xf32, #tpu.memory_space<vmem>>, vector<1x5x72xf32>
    %8 = vector.shape_cast %7 : vector<1x5x72xf32> to vector<5x72xf32>
    %9 = tpu.concatenate %4, %8 in 1 : vector<5x72xf32>, vector<5x72xf32> -> vector<5x144xf32>
    %c0_3 = arith.constant 0 : index
    %c0_4 = arith.constant 0 : index
    %10 = vector.load %arg4[%c0_3, %c0_4] : memref<72x64xf32, #tpu.memory_space<vmem>>, vector<72x64xf32>
    %cst = arith.constant dense<0.000000e+00> : vector<5x64xf32>
    %11 = tpu.matmul %8, %10, %cst {dimension_numbers = #tpu.dot_dimension_numbers<[1], [0], [0], [1], [0, 0, 1, 1], [], []>} : vector<5x72xf32>, vector<72x64xf32>, vector<5x64xf32> -> vector<5x64xf32>
    %c0_5 = arith.constant 0 : index
    %c0_6 = arith.constant 0 : index
    %12 = vector.load %arg6[%c0_5, %c0_6] : memref<1x64xf32, #tpu.memory_space<vmem>>, vector<1x64xf32>
    %13 = vector.broadcast %12 : vector<1x64xf32> to vector<5x64xf32>
    %14 = arith.addf %11, %13 : vector<5x64xf32>
    %c0_7 = arith.constant 0 : index
    %c0_8 = arith.constant 0 : index
    %15 = vector.load %arg5[%c0_7, %c0_8] : memref<144x64xf32, #tpu.memory_space<vmem>>, vector<144x64xf32>
    %cst_9 = arith.constant dense<0.000000e+00> : vector<5x64xf32>
    %16 = tpu.matmul %9, %15, %cst_9 {dimension_numbers = #tpu.dot_dimension_numbers<[1], [0], [0], [1], [0, 0, 1, 1], [], []>} : vector<5x144xf32>, vector<144x64xf32>, vector<5x64xf32> -> vector<5x64xf32>
    %c0_10 = arith.constant 0 : index
    %c0_11 = arith.constant 0 : index
    %17 = vector.load %arg6[%c0_10, %c0_11] : memref<1x64xf32, #tpu.memory_space<vmem>>, vector<1x64xf32>
    %18 = vector.broadcast %17 : vector<1x64xf32> to vector<5x64xf32>
    %19 = arith.addf %16, %18 : vector<5x64xf32>
    %cst_12 = arith.constant 0.000000e+00 : f32
    %20 = vector.broadcast %cst_12 : f32 to vector<5x64xf32>
    %21 = arith.maximumf %14, %20 : vector<5x64xf32>
    %cst_13 = arith.constant 0.000000e+00 : f32
    %22 = vector.broadcast %cst_13 : f32 to vector<5x64xf32>
    %23 = arith.maximumf %19, %22 : vector<5x64xf32>
    %24 = vector.shape_cast %23 : vector<5x64xf32> to vector<5x1x64xf32>
    %25 = vector.shape_cast %21 : vector<5x64xf32> to vector<5x1x64xf32>
    %26 = tpu.concatenate %24, %25 in 1 : vector<5x1x64xf32>, vector<5x1x64xf32> -> vector<5x2x64xf32>
    %27 = vector.shape_cast %26 : vector<5x2x64xf32> to vector<10x64xf32>
    %cst_14 = arith.constant 0.000000e+00 : f32
    %28 = vector.broadcast %cst_14 : f32 to vector<10x4xf32>
    %29 = tpu.concatenate %28, %27, %28 in 1 : vector<10x4xf32>, vector<10x64xf32>, vector<10x4xf32> -> vector<10x72xf32>
    %30 = tpu.iota {dimensions = array<i32: 0>} : vector<10x1xi32>
    %c1_i32_15 = arith.constant 1 : i32
    %31 = arith.subi %1, %c1_i32_15 : i32
    %32 = vector.broadcast %31 : i32 to vector<10x1xi32>
    %33 = arith.addi %32, %30 : vector<10x1xi32>
    %c0_i32 = arith.constant 0 : i32
    %34 = vector.broadcast %c0_i32 : i32 to vector<10x1xi32>
    %35 = arith.cmpi sge, %33, %34 : vector<10x1xi32>
    %c16_i32 = arith.constant 16 : i32
    %36 = vector.broadcast %c16_i32 : i32 to vector<10x1xi32>
    %37 = arith.cmpi slt, %33, %36 : vector<10x1xi32>
    %38 = arith.andi %35, %37 : vector<10x1xi1>
    %cst_16 = arith.constant 0.000000e+00 : f32
    %39 = vector.shape_cast %38 : vector<10x1xi1> to vector<10x1xi1>
    %40 = vector.broadcast %39 : vector<10x1xi1> to vector<10x72xi1>
    %41 = vector.broadcast %cst_16 : f32 to vector<10x72xf32>
    %42 = arith.select %40, %29, %41 : vector<10x72xi1>, vector<10x72xf32>
    %43 = vector.extract_strided_slice %42 {offsets = [0, 0], sizes = [8, 72], strides = [1, 1]} : vector<10x72xf32> to vector<8x72xf32>
    %44 = vector.extract_strided_slice %42 {offsets = [1, 0], sizes = [8, 72], strides = [1, 1]} : vector<10x72xf32> to vector<8x72xf32>
    %45 = vector.extract_strided_slice %42 {offsets = [2, 0], sizes = [8, 72], strides = [1, 1]} : vector<10x72xf32> to vector<8x72xf32>
    %46 = tpu.concatenate %43, %44, %45 in 1 : vector<8x72xf32>, vector<8x72xf32>, vector<8x72xf32> -> vector<8x216xf32>
    %c0_i32_17 = arith.constant 0 : i32
    %47 = arith.addi %1, %c0_i32_17 : i32
    %c0_18 = arith.constant 0 : index
    %48 = arith.index_cast %47 : i32 to index
    %c0_19 = arith.constant 0 : index
    %49 = vector.load %arg3[%c0_18, %48, %c0_19] : memref<1x18x72xf32, #tpu.memory_space<vmem>>, vector<1x8x72xf32>
    %50 = vector.shape_cast %49 : vector<1x8x72xf32> to vector<8x72xf32>
    %c1_i32_20 = arith.constant 1 : i32
    %51 = arith.addi %1, %c1_i32_20 : i32
    %c0_21 = arith.constant 0 : index
    %52 = arith.index_cast %51 : i32 to index
    %c0_22 = arith.constant 0 : index
    %53 = vector.load %arg3[%c0_21, %52, %c0_22] : memref<1x18x72xf32, #tpu.memory_space<vmem>>, vector<1x8x72xf32>
    %54 = vector.shape_cast %53 : vector<1x8x72xf32> to vector<8x72xf32>
    %c2_i32 = arith.constant 2 : i32
    %55 = arith.addi %1, %c2_i32 : i32
    %c0_23 = arith.constant 0 : index
    %56 = arith.index_cast %55 : i32 to index
    %c0_24 = arith.constant 0 : index
    %57 = vector.load %arg3[%c0_23, %56, %c0_24] : memref<1x18x72xf32, #tpu.memory_space<vmem>>, vector<1x8x72xf32>
    %58 = vector.shape_cast %57 : vector<1x8x72xf32> to vector<8x72xf32>
    %59 = tpu.concatenate %50, %54, %58 in 1 : vector<8x72xf32>, vector<8x72xf32>, vector<8x72xf32> -> vector<8x216xf32>
    %c0_25 = arith.constant 0 : index
    %c0_26 = arith.constant 0 : index
    %60 = vector.load %arg7[%c0_25, %c0_26] : memref<216x128xf32, #tpu.memory_space<vmem>>, vector<216x128xf32>
    %cst_27 = arith.constant dense<0.000000e+00> : vector<8x128xf32>
    %61 = tpu.matmul %46, %60, %cst_27 {dimension_numbers = #tpu.dot_dimension_numbers<[1], [0], [0], [1], [0, 0, 1, 1], [], []>} : vector<8x216xf32>, vector<216x128xf32>, vector<8x128xf32> -> vector<8x128xf32>
    %c0_28 = arith.constant 0 : index
    %c0_29 = arith.constant 0 : index
    %62 = vector.load %arg8[%c0_28, %c0_29] : memref<216x128xf32, #tpu.memory_space<vmem>>, vector<216x128xf32>
    %cst_30 = arith.constant dense<0.000000e+00> : vector<8x128xf32>
    %63 = tpu.matmul %59, %62, %cst_30 {dimension_numbers = #tpu.dot_dimension_numbers<[1], [0], [0], [1], [0, 0, 1, 1], [], []>} : vector<8x216xf32>, vector<216x128xf32>, vector<8x128xf32> -> vector<8x128xf32>
    %64 = arith.addf %61, %63 : vector<8x128xf32>
    %c0_31 = arith.constant 0 : index
    %c0_32 = arith.constant 0 : index
    %65 = vector.load %arg9[%c0_31, %c0_32] : memref<1x128xf32, #tpu.memory_space<vmem>>, vector<1x128xf32>
    %66 = vector.broadcast %65 : vector<1x128xf32> to vector<8x128xf32>
    %67 = arith.addf %64, %66 : vector<8x128xf32>
    %cst_33 = arith.constant 0.000000e+00 : f32
    %68 = vector.broadcast %cst_33 : f32 to vector<8x128xf32>
    %69 = arith.maximumf %67, %68 : vector<8x128xf32>
    %70 = vector.shape_cast %69 : vector<8x128xf32> to vector<1x8x128xf32>
    %c0_34 = arith.constant 0 : index
    %c0_35 = arith.constant 0 : index
    %c0_36 = arith.constant 0 : index
    %71 = vector.load %arg10[%c0_34, %c0_35, %c0_36] : memref<1x8x128xf32, #tpu.memory_space<vmem>>, vector<1x8x128xf32>
    tpu.vector_store %arg10[%c0_34, %c0_35, %c0_36], %70 {strides = array<i32>} : memref<1x8x128xf32, #tpu.memory_space<vmem>>, vector<1x8x128xf32>,
    return
  }
  func.func @transform_0(%arg0: i32, %arg1: i32) -> (i32, i32, i32) {
    %c0_i32 = arith.constant 0 : i32
    %c0_i32_0 = arith.constant 0 : i32
    %c0_i32_1 = arith.constant 0 : i32
    return %arg0, %c0_i32, %c0_i32_0 : i32, i32, i32
  }
  func.func @transform_1(%arg0: i32, %arg1: i32) -> (i32, i32, i32) {
    %c0_i32 = arith.constant 0 : i32
    %c0_i32_0 = arith.constant 0 : i32
    %c0_i32_1 = arith.constant 0 : i32
    return %arg0, %c0_i32, %c0_i32_0 : i32, i32, i32
  }
  func.func @transform_2(%arg0: i32, %arg1: i32) -> (i32, i32) {
    %c0_i32 = arith.constant 0 : i32
    %c0_i32_0 = arith.constant 0 : i32
    %c0_i32_1 = arith.constant 0 : i32
    return %c0_i32, %c0_i32_0 : i32, i32
  }
  func.func @transform_3(%arg0: i32, %arg1: i32) -> (i32, i32) {
    %c0_i32 = arith.constant 0 : i32
    %c0_i32_0 = arith.constant 0 : i32
    %c0_i32_1 = arith.constant 0 : i32
    return %c0_i32, %c0_i32_0 : i32, i32
  }
  func.func @transform_4(%arg0: i32, %arg1: i32) -> (i32, i32) {
    %c0_i32 = arith.constant 0 : i32
    %c0_i32_0 = arith.constant 0 : i32
    %c0_i32_1 = arith.constant 0 : i32
    return %c0_i32, %c0_i32_0 : i32, i32
  }
  func.func @transform_5(%arg0: i32, %arg1: i32) -> (i32, i32) {
    %c0_i32 = arith.constant 0 : i32
    %c0_i32_0 = arith.constant 0 : i32
    %c0_i32_1 = arith.constant 0 : i32
    return %c0_i32, %c0_i32_0 : i32, i32
  }
  func.func @transform_6(%arg0: i32, %arg1: i32) -> (i32, i32) {
    %c0_i32 = arith.constant 0 : i32
    %c0_i32_0 = arith.constant 0 : i32
    %c0_i32_1 = arith.constant 0 : i32
    return %c0_i32, %c0_i32_0 : i32, i32
  }
  func.func @transform_7(%arg0: i32, %arg1: i32) -> (i32, i32) {
    %c0_i32 = arith.constant 0 : i32
    %c0_i32_0 = arith.constant 0 : i32
    %c0_i32_1 = arith.constant 0 : i32
    return %c0_i32, %c0_i32_0 : i32, i32
  }
  func.func @transform_8(%arg0: i32, %arg1: i32) -> (i32, i32, i32) {
    %c0_i32 = arith.constant 0 : i32
    %c0_i32_0 = arith.constant 0 : i32
    return %arg0, %arg1, %c0_i32 : i32, i32, i32
  }
}

</mosaic_0001>

<llo_original>
// kernel: tile.13
$region0: #{tile.13}
  #allocation0 [shape = 's32[1]{0}', space=sflag, size = 0x4, scoped, tag = 'scoped memory for tile.13']
  %s0 = inlined_call_operand.vmem [shape: f32[4], index: 0, kind: input, shape index: {}]
  %s1 = inlined_call_operand.vmem [shape: f32[16,4], index: 1, kind: output, shape index: {}]
  // Predicated region
  $region2: #{tile.13} parent=0 // pred_check
    _
  $region3: #{tile.13} parent=0 // pred_check_branch
    %3 = sbr.rel (0) target = $region5
  $region4: #{tile.13} parent=0 // pred_region
    _
  $region5: #{tile.13} parent=0 // pred_fallthru
    _
  %v4 = vld [vmem:[%s0] ss:$0 sm:$0xff]
  %5 = vst [vmem:[%s1] sm:$0xff] %v4
  %s6 = scalar_lea.vmem %s1, 8
  %7 = vst [vmem:[%s6] sm:$0xff] %v4

// kernel: tile.14
$region0: #{tile.14}
  %s0 = inlined_call_operand.vmem [shape: f32[16,4], index: 0, kind: input, shape index: {}]
  %s1 = inlined_call_operand.vmem [shape: f32[1,64], index: 1, kind: output, shape index: {}]
  $region1: #{tile.14} parent=0
    #allocation0 [shape = 'u8[4096]{0}', space=vmem, size = 0x1000, scoped, tag = 'scoped mem for output reshape']
    %v2 = vld [vmem:[%s0] sm:$0x1]
    %vm3 = vcmask 31744
    %4 = vst.msk [vmem:[#allocation0] sm:$0x1] %vm3, %v2
    %s5 = scalar_lea.vmem %s0, 15
    %v6 = vld [vmem:[%s5] sm:$0x1]
    %7 = vrot.lane.b32.xlu0 %v6, 60
    %v8 = vpop.permute.xlu0 %7
    %vm9 = vcmask 523744
    %10 = vst.msk [vmem:[#allocation0] sm:$0x1] %vm9, %v8
    %s11 = scalar_lea.vmem %s0, 14
    %v12 = vld [vmem:[%s11] sm:$0x1]
    %13 = vrot.lane.b32.xlu0 %v12, 56
    %v14 = vpop.permute.xlu0 %13
    %vm15 = vcmask 490944
    %16 = vst.msk [vmem:[#allocation0] sm:$0x1] %vm15, %v14
    %s17 = scalar_lea.vmem %s0, 13
    %v18 = vld [vmem:[%s17] sm:$0x1]
    %19 = vrot.lane.b32.xlu0 %v18, 52
    %v20 = vpop.permute.xlu0 %19
    %vm21 = vcmask 458144
    %22 = vst.msk [vmem:[#allocation0] sm:$0x1] %vm21, %v20
    %s23 = scalar_lea.vmem %s0, 12
    %v24 = vld [vmem:[%s23] sm:$0x1]
    %25 = vrot.lane.b32.xlu0 %v24, 48
    %v26 = vpop.permute.xlu0 %25
    %vm27 = vcmask 425344
    %28 = vst.msk [vmem:[#allocation0] sm:$0x1] %vm27, %v26
    %s29 = scalar_lea.vmem %s0, 11
    %v30 = vld [vmem:[%s29] sm:$0x1]
    %31 = vrot.lane.b32.xlu0 %v30, 44
    %v32 = vpop.permute.xlu0 %31
    %vm33 = vcmask 392544
    %34 = vst.msk [vmem:[#allocation0] sm:$0x1] %vm33, %v32
    %s35 = scalar_lea.vmem %s0, 10
    %v36 = vld [vmem:[%s35] sm:$0x1]
    %37 = vrot.lane.b32.xlu0 %v36, 40
    %v38 = vpop.permute.xlu0 %37
    %vm39 = vcmask 359744
    %40 = vst.msk [vmem:[#allocation0] sm:$0x1] %vm39, %v38
    %s41 = scalar_lea.vmem %s0, 9
    %v42 = vld [vmem:[%s41] sm:$0x1]
    %43 = vrot.lane.b32.xlu0 %v42, 36
    %v44 = vpop.permute.xlu0 %43
    %vm45 = vcmask 326944
    %46 = vst.msk [vmem:[#allocation0] sm:$0x1] %vm45, %v44
    %s47 = scalar_lea.vmem %s0, 8
    %v48 = vld [vmem:[%s47] sm:$0x1]
    %49 = vrot.lane.b32.xlu0 %v48, 32
    %v50 = vpop.permute.xlu0 %49
    %vm51 = vcmask 294144
    %52 = vst.msk [vmem:[#allocation0] sm:$0x1] %vm51, %v50
    %s53 = scalar_lea.vmem %s0, 7
    %v54 = vld [vmem:[%s53] sm:$0x1]
    %55 = vrot.lane.b32.xlu0 %v54, 28
    %v56 = vpop.permute.xlu0 %55
    %vm57 = vcmask 261344
    %58 = vst.msk [vmem:[#allocation0] sm:$0x1] %vm57, %v56
    %s59 = scalar_lea.vmem %s0, 6
    %v60 = vld [vmem:[%s59] sm:$0x1]
    %61 = vrot.lane.b32.xlu0 %v60, 24
    %v62 = vpop.permute.xlu0 %61
    %vm63 = vcmask 228544
    %64 = vst.msk [vmem:[#allocation0] sm:$0x1] %vm63, %v62
    %s65 = scalar_lea.vmem %s0, 5
    %v66 = vld [vmem:[%s65] sm:$0x1]
    %67 = vrot.lane.b32.xlu0 %v66, 20
    %v68 = vpop.permute.xlu0 %67
    %vm69 = vcmask 195744
    %70 = vst.msk [vmem:[#allocation0] sm:$0x1] %vm69, %v68
    %s71 = scalar_lea.vmem %s0, 4
    %v72 = vld [vmem:[%s71] sm:$0x1]
    %73 = vrot.lane.b32.xlu0 %v72, 16
    %v74 = vpop.permute.xlu0 %73
    %vm75 = vcmask 162944
    %76 = vst.msk [vmem:[#allocation0] sm:$0x1] %vm75, %v74
    %s77 = scalar_lea.vmem %s0, 3
    %v78 = vld [vmem:[%s77] sm:$0x1]
    %79 = vrot.lane.b32.xlu0 %v78, 12
    %v80 = vpop.permute.xlu0 %79
    %vm81 = vcmask 130144
    %82 = vst.msk [vmem:[#allocation0] sm:$0x1] %vm81, %v80
    %s83 = scalar_lea.vmem %s0, 2
    %v84 = vld [vmem:[%s83] sm:$0x1]
    %85 = vrot.lane.b32.xlu0 %v84, 8
    %v86 = vpop.permute.xlu0 %85
    %vm87 = vcmask 97344
    %88 = vst.msk [vmem:[#allocation0] sm:$0x1] %vm87, %v86
    %s89 = scalar_lea.vmem %s0, 1
    %v90 = vld [vmem:[%s89] sm:$0x1]
    %91 = vrot.lane.b32.xlu0 %v90, 4
    %v92 = vpop.permute.xlu0 %91
    %vm93 = vcmask 64544
    %94 = vst.msk [vmem:[#allocation0] sm:$0x1] %vm93, %v92
    %s96 = ssub.s32 2, 1
    %v97 = vld [vmem:[#allocation0] sm:%s96]
    %s99 = ssub.s32 2, 1
    %100 = vst [vmem:[%s1] sm:%s99] %v97

// kernel: tile.18
$region0: #{tile.18}
  #allocation0 [shape = 's32[1]{0}', space=sflag, size = 0x4, scoped, tag = 'scoped memory for tile.18']
  %s0 = inlined_call_operand.vmem [shape: f32[8], index: 0, kind: input, shape index: {}]
  %s1 = inlined_call_operand.vmem [shape: f32[16,8], index: 1, kind: output, shape index: {}]
  // Predicated region
  $region2: #{tile.18} parent=0 // pred_check
    _
  $region3: #{tile.18} parent=0 // pred_check_branch
    %3 = sbr.rel (0) target = $region5
  $region4: #{tile.18} parent=0 // pred_region
    _
  $region5: #{tile.18} parent=0 // pred_fallthru
    _
  %v4 = vld [vmem:[%s0] ss:$0 sm:$0xff]
  %5 = vst [vmem:[%s1] sm:$0xff] %v4
  %s6 = scalar_lea.vmem %s1, 8
  %7 = vst [vmem:[%s6] sm:$0xff] %v4

// kernel: tile.19
$region0: #{tile.19}
  %s0 = inlined_call_operand.vmem [shape: f32[16,8], index: 0, kind: input, shape index: {}]
  %s1 = inlined_call_operand.vmem [shape: f32[1,128], index: 1, kind: output, shape index: {}]
  $region1: #{tile.19} parent=0
    #allocation0 [shape = 'u8[4096]{0}', space=vmem, size = 0x1000, scoped, tag = 'scoped mem for output reshape']
    %v2 = vld [vmem:[%s0] sm:$0x1]
    %vm3 = vcmask 64512
    %4 = vst.msk [vmem:[#allocation0] sm:$0x1] %vm3, %v2
    %s5 = scalar_lea.vmem %s0, 15
    %v6 = vld [vmem:[%s5] sm:$0x1]
    %7 = vrot.lane.b32.xlu0 %v6, 120
    %v8 = vpop.permute.xlu0 %7
    %vm9 = vcmask 1048512
    %10 = vst.msk [vmem:[#allocation0] sm:$0x1] %vm9, %v8
    %s11 = scalar_lea.vmem %s0, 14
    %v12 = vld [vmem:[%s11] sm:$0x1]
    %13 = vrot.lane.b32.xlu0 %v12, 112
    %v14 = vpop.permute.xlu0 %13
    %vm15 = vcmask 982912
    %16 = vst.msk [vmem:[#allocation0] sm:$0x1] %vm15, %v14
    %s17 = scalar_lea.vmem %s0, 13
    %v18 = vld [vmem:[%s17] sm:$0x1]
    %19 = vrot.lane.b32.xlu0 %v18, 104
    %v20 = vpop.permute.xlu0 %19
    %vm21 = vcmask 917312
    %22 = vst.msk [vmem:[#allocation0] sm:$0x1] %vm21, %v20
    %s23 = scalar_lea.vmem %s0, 12
    %v24 = vld [vmem:[%s23] sm:$0x1]
    %25 = vrot.lane.b32.xlu0 %v24, 96
    %v26 = vpop.permute.xlu0 %25
    %vm27 = vcmask 851712
    %28 = vst.msk [vmem:[#allocation0] sm:$0x1] %vm27, %v26
    %s29 = scalar_lea.vmem %s0, 11
    %v30 = vld [vmem:[%s29] sm:$0x1]
    %31 = vrot.lane.b32.xlu0 %v30, 88
    %v32 = vpop.permute.xlu0 %31
    %vm33 = vcmask 786112
    %34 = vst.msk [vmem:[#allocation0] sm:$0x1] %vm33, %v32
    %s35 = scalar_lea.vmem %s0, 10
    %v36 = vld [vmem:[%s35] sm:$0x1]
    %37 = vrot.lane.b32.xlu0 %v36, 80
    %v38 = vpop.permute.xlu0 %37
    %vm39 = vcmask 720512
    %40 = vst.msk [vmem:[#allocation0] sm:$0x1] %vm39, %v38
    %s41 = scalar_lea.vmem %s0, 9
    %v42 = vld [vmem:[%s41] sm:$0x1]
    %43 = vrot.lane.b32.xlu0 %v42, 72
    %v44 = vpop.permute.xlu0 %43
    %vm45 = vcmask 654912
    %46 = vst.msk [vmem:[#allocation0] sm:$0x1] %vm45, %v44
    %s47 = scalar_lea.vmem %s0, 8
    %v48 = vld [vmem:[%s47] sm:$0x1]
    %49 = vrot.lane.b32.xlu0 %v48, 64
    %v50 = vpop.permute.xlu0 %49
    %vm51 = vcmask 589312
    %52 = vst.msk [vmem:[#allocation0] sm:$0x1] %vm51, %v50
    %s53 = scalar_lea.vmem %s0, 7
    %v54 = vld [vmem:[%s53] sm:$0x1]
    %55 = vrot.lane.b32.xlu0 %v54, 56
    %v56 = vpop.permute.xlu0 %55
    %vm57 = vcmask 523712
    %58 = vst.msk [vmem:[#allocation0] sm:$0x1] %vm57, %v56
    %s59 = scalar_lea.vmem %s0, 6
    %v60 = vld [vmem:[%s59] sm:$0x1]
    %61 = vrot.lane.b32.xlu0 %v60, 48
    %v62 = vpop.permute.xlu0 %61
    %vm63 = vcmask 458112
    %64 = vst.msk [vmem:[#allocation0] sm:$0x1] %vm63, %v62
    %s65 = scalar_lea.vmem %s0, 5
    %v66 = vld [vmem:[%s65] sm:$0x1]
    %67 = vrot.lane.b32.xlu0 %v66, 40
    %v68 = vpop.permute.xlu0 %67
    %vm69 = vcmask 392512
    %70 = vst.msk [vmem:[#allocation0] sm:$0x1] %vm69, %v68
    %s71 = scalar_lea.vmem %s0, 4
    %v72 = vld [vmem:[%s71] sm:$0x1]
    %73 = vrot.lane.b32.xlu0 %v72, 32
    %v74 = vpop.permute.xlu0 %73
    %vm75 = vcmask 326912
    %76 = vst.msk [vmem:[#allocation0] sm:$0x1] %vm75, %v74
    %s77 = scalar_lea.vmem %s0, 3
    %v78 = vld [vmem:[%s77] sm:$0x1]
    %79 = vrot.lane.b32.xlu0 %v78, 24
    %v80 = vpop.permute.xlu0 %79
    %vm81 = vcmask 261312
    %82 = vst.msk [vmem:[#allocation0] sm:$0x1] %vm81, %v80
    %s83 = scalar_lea.vmem %s0, 2
    %v84 = vld [vmem:[%s83] sm:$0x1]
    %85 = vrot.lane.b32.xlu0 %v84, 16
    %v86 = vpop.permute.xlu0 %85
    %vm87 = vcmask 195712
    %88 = vst.msk [vmem:[#allocation0] sm:$0x1] %vm87, %v86
    %s89 = scalar_lea.vmem %s0, 1
    %v90 = vld [vmem:[%s89] sm:$0x1]
    %91 = vrot.lane.b32.xlu0 %v90, 8
    %v92 = vpop.permute.xlu0 %91
    %vm93 = vcmask 130112
    %94 = vst.msk [vmem:[#allocation0] sm:$0x1] %vm93, %v92
    %s96 = ssub.s32 2, 1
    %v97 = vld [vmem:[#allocation0] sm:%s96]
    %s99 = ssub.s32 2, 1
    %100 = vst [vmem:[%s1] sm:%s99] %v97

// kernel: ternaus_up_forward.1
$region0: #{ternaus_up_forward.1}
  #allocation0 [shape = 'u32[]', space=smem, size = 0x4, offset = 0x4, fixed_abs, tag = 'smem constant byte address 0x4 - core index']
  #allocation1 [shape = 'u32[72,128]{1,0:T(1,128)}', space=vmem, size = 0x9000, scoped, tag = 'internal scratch']
  %s0 = inlined_call_operand.vmem [shape: f32[2,10,72], index: 0, kind: input, shape index: {}]
  %s1 = inlined_call_operand.vmem [shape: f32[2,18,72], index: 1, kind: input, shape index: {}]
  %s2 = inlined_call_operand.vmem [shape: f32[72,64], index: 2, kind: input, shape index: {}]
  %s3 = inlined_call_operand.vmem [shape: f32[144,64], index: 3, kind: input, shape index: {}]
  %s4 = inlined_call_operand.vmem [shape: f32[1,64], index: 4, kind: input, shape index: {}]
  %s5 = inlined_call_operand.vmem [shape: f32[216,128], index: 5, kind: input, shape index: {}]
  %s6 = inlined_call_operand.vmem [shape: f32[216,128], index: 6, kind: input, shape index: {}]
  %s7 = inlined_call_operand.vmem [shape: f32[1,128], index: 7, kind: input, shape index: {}]
  %s8 = inlined_call_operand.vmem [shape: f32[2,16,128], index: 8, kind: output, shape index: {}]
  %s9 = sld [smem:[#allocation0]]
  $region65: #{ternaus_up_forward.1} parent=0
    _
  %s11 = ssub.s32 1, %s9
  %s12 = scalar_select 0, %s11, %s9
  loop: start=0, step=1, limit=6
  $region2: #{ternaus_up_forward.1} parent=0 // loop_pre_header
    _
  $region3: #{ternaus_up_forward.1} parent=0 // loop_header
    %s14 = sphi 0, %s18
    %p15 = scmp.ge.s32.totalorder %s14, 6
    %s21 = sphi 0, %s33
    %s22 = sphi 0, %s29
    %s23 = sphi 0, %s21
    %s24 = sphi 0, %s22
    %s25 = sphi 0, %s23
    %s26 = sphi 0, %s24
    %s36 = sphi 0, %s38
    %s39 = sphi 0, %s36
    %s40 = sphi 0, %s39
    %s56 = sphi 0, %s40
    %s62 = sphi 0, %s64
    %s65 = sphi 0, %s62
    %s66 = sphi 0, %s65
    %s82 = sphi 0, %s66
    %s86 = sphi 0, %s86
    %s88 = sphi 0, %s86
    %s89 = sphi 0, %s88
    %s103 = sphi 0, %s89
    %s107 = sphi 0, %s107
    %s109 = sphi 0, %s107
    %s110 = sphi 0, %s109
    %s124 = sphi 0, %s110
    %s128 = sphi 0, %s128
    %s130 = sphi 0, %s128
    %s131 = sphi 0, %s130
    %s145 = sphi 0, %s131
    %s149 = sphi 0, %s149
    %s151 = sphi 0, %s149
    %s152 = sphi 0, %s151
    %s166 = sphi 0, %s152
    %s170 = sphi 0, %s170
    %s172 = sphi 0, %s170
    %s173 = sphi 0, %s172
    %s187 = sphi 0, %s173
    %s191 = sphi 0, %s191
    %s193 = sphi 0, %s191
    %s194 = sphi 0, %s193
    %s208 = sphi 0, %s194
    %s216 = sphi 0, %s218
    %s219 = sphi 0, %s216
    %s220 = sphi 0, %s219
    %s236 = sphi 0, %s220
  $region4: #{ternaus_up_forward.1} parent=0 // loop_header_branch
    %17 = sbr.rel (%p15) target = $region8
  $region5: #{ternaus_up_forward.1} parent=0 // loop_body
    %s19 = ssub.s32 %s14, 1
    %s20 = ssub.s32 %s14, 2
    %s27 = sadd.s32 1, %s22
    %p28 = scmp.ge.s32.totalorder %s27, 2
    %s29 = scalar_select %p28, 0, %s27
    %s30 = sadd.s32 1, %s21
    %s31 = scalar_select %p28, %s30, %s21
    %p32 = scmp.ge.s32.totalorder %s31, 2
    %s33 = scalar_select %p32, 0, %s31
    %s34 = ssub.s32 %s21, %s33
    %p35 = scmp.eq.s32.totalorder %s34, 0
    %s37 = sadd.s32 %s36, 1
    %s38 = scalar_select %p35, %s36, %s37
    %p41 = pneg %p35
    %p42 = scmp.eq.s32.totalorder %s14, 3
    %p43 = por %p41, %p42
    %p44 = scmp.ne.s32.totalorder %s36, %s39
    %p45 = scmp.eq.s32.totalorder %s14, 0
    %p46 = por %p44, %p45
    %p47 = scmp.ne.s32.totalorder %s36, %s39
    %p48 = scmp.eq.s32.totalorder %s19, 3
    %p49 = por %p47, %p48
    %p50 = scmp.ne.s32.totalorder %s39, %s40
    %p51 = scmp.eq.s32.totalorder %s19, 0
    %p52 = por %p50, %p51
    %p53 = scmp.ne.s32.totalorder %s39, %s40
    %p54 = scmp.eq.s32.totalorder %s20, 3
    %p55 = por %p53, %p54
    %p57 = scmp.ne.s32.totalorder %s40, %s56
    %p58 = scmp.eq.s32.totalorder %s20, 0
    %p59 = por %p57, %p58
    %s60 = ssub.s32 %s21, %s33
    %p61 = scmp.eq.s32.totalorder %s60, 0
    %s63 = sadd.s32 %s62, 1
    %s64 = scalar_select %p61, %s62, %s63
    %p67 = pneg %p61
    %p68 = scmp.eq.s32.totalorder %s14, 3
    %p69 = por %p67, %p68
    %p70 = scmp.ne.s32.totalorder %s62, %s65
    %p71 = scmp.eq.s32.totalorder %s14, 0
    %p72 = por %p70, %p71
    %p73 = scmp.ne.s32.totalorder %s62, %s65
    %p74 = scmp.eq.s32.totalorder %s19, 3
    %p75 = por %p73, %p74
    %p76 = scmp.ne.s32.totalorder %s65, %s66
    %p77 = scmp.eq.s32.totalorder %s19, 0
    %p78 = por %p76, %p77
    %p79 = scmp.ne.s32.totalorder %s65, %s66
    %p80 = scmp.eq.s32.totalorder %s20, 3
    %p81 = por %p79, %p80
    %p83 = scmp.ne.s32.totalorder %s66, %s82
    %p84 = scmp.eq.s32.totalorder %s20, 0
    %p85 = por %p83, %p84
    %s87 = sadd.s32 %s86, 1
    %p90 = scmp.eq.s32.totalorder %s14, 3
    %p91 = scmp.ne.s32.totalorder %s86, %s88
    %p92 = scmp.eq.s32.totalorder %s14, 0
    %p93 = por %p91, %p92
    %p94 = scmp.ne.s32.totalorder %s86, %s88
    %p95 = scmp.eq.s32.totalorder %s19, 3
    %p96 = por %p94, %p95
    %p97 = scmp.ne.s32.totalorder %s88, %s89
    %p98 = scmp.eq.s32.totalorder %s19, 0
    %p99 = por %p97, %p98
    %p100 = scmp.ne.s32.totalorder %s88, %s89
    %p101 = scmp.eq.s32.totalorder %s20, 3
    %p102 = por %p100, %p101
    %p104 = scmp.ne.s32.totalorder %s89, %s103
    %p105 = scmp.eq.s32.totalorder %s20, 0
    %p106 = por %p104, %p105
    %s108 = sadd.s32 %s107, 1
    %p111 = scmp.eq.s32.totalorder %s14, 3
    %p112 = scmp.ne.s32.totalorder %s107, %s109
    %p113 = scmp.eq.s32.totalorder %s14, 0
    %p114 = por %p112, %p113
    %p115 = scmp.ne.s32.totalorder %s107, %s109
    %p116 = scmp.eq.s32.totalorder %s19, 3
    %p117 = por %p115, %p116
    %p118 = scmp.ne.s32.totalorder %s109, %s110
    %p119 = scmp.eq.s32.totalorder %s19, 0
    %p120 = por %p118, %p119
    %p121 = scmp.ne.s32.totalorder %s109, %s110
    %p122 = scmp.eq.s32.totalorder %s20, 3
    %p123 = por %p121, %p122
    %p125 = scmp.ne.s32.totalorder %s110, %s124
    %p126 = scmp.eq.s32.totalorder %s20, 0
    %p127 = por %p125, %p126
    %s129 = sadd.s32 %s128, 1
    %p132 = scmp.eq.s32.totalorder %s14, 3
    %p133 = scmp.ne.s32.totalorder %s128, %s130
    %p134 = scmp.eq.s32.totalorder %s14, 0
    %p135 = por %p133, %p134
    %p136 = scmp.ne.s32.totalorder %s128, %s130
    %p137 = scmp.eq.s32.totalorder %s19, 3
    %p138 = por %p136, %p137
    %p139 = scmp.ne.s32.totalorder %s130, %s131
    %p140 = scmp.eq.s32.totalorder %s19, 0
    %p141 = por %p139, %p140
    %p142 = scmp.ne.s32.totalorder %s130, %s131
    %p143 = scmp.eq.s32.totalorder %s20, 3
    %p144 = por %p142, %p143
    %p146 = scmp.ne.s32.totalorder %s131, %s145
    %p147 = scmp.eq.s32.totalorder %s20, 0
    %p148 = por %p146, %p147
    %s150 = sadd.s32 %s149, 1
    %p153 = scmp.eq.s32.totalorder %s14, 3
    %p154 = scmp.ne.s32.totalorder %s149, %s151
    %p155 = scmp.eq.s32.totalorder %s14, 0
    %p156 = por %p154, %p155
    %p157 = scmp.ne.s32.totalorder %s149, %s151
    %p158 = scmp.eq.s32.totalorder %s19, 3
    %p159 = por %p157, %p158
    %p160 = scmp.ne.s32.totalorder %s151, %s152
    %p161 = scmp.eq.s32.totalorder %s19, 0
    %p162 = por %p160, %p161
    %p163 = scmp.ne.s32.totalorder %s151, %s152
    %p164 = scmp.eq.s32.totalorder %s20, 3
    %p165 = por %p163, %p164
    %p167 = scmp.ne.s32.totalorder %s152, %s166
    %p168 = scmp.eq.s32.totalorder %s20, 0
    %p169 = por %p167, %p168
    %s171 = sadd.s32 %s170, 1
    %p174 = scmp.eq.s32.totalorder %s14, 3
    %p175 = scmp.ne.s32.totalorder %s170, %s172
    %p176 = scmp.eq.s32.totalorder %s14, 0
    %p177 = por %p175, %p176
    %p178 = scmp.ne.s32.totalorder %s170, %s172
    %p179 = scmp.eq.s32.totalorder %s19, 3
    %p180 = por %p178, %p179
    %p181 = scmp.ne.s32.totalorder %s172, %s173
    %p182 = scmp.eq.s32.totalorder %s19, 0
    %p183 = por %p181, %p182
    %p184 = scmp.ne.s32.totalorder %s172, %s173
    %p185 = scmp.eq.s32.totalorder %s20, 3
    %p186 = por %p184, %p185
    %p188 = scmp.ne.s32.totalorder %s173, %s187
    %p189 = scmp.eq.s32.totalorder %s20, 0
    %p190 = por %p188, %p189
    %s192 = sadd.s32 %s191, 1
    %p195 = scmp.eq.s32.totalorder %s14, 3
    %p196 = scmp.ne.s32.totalorder %s191, %s193
    %p197 = scmp.eq.s32.totalorder %s14, 0
    %p198 = por %p196, %p197
    %p199 = scmp.ne.s32.totalorder %s191, %s193
    %p200 = scmp.eq.s32.totalorder %s19, 3
    %p201 = por %p199, %p200
    %p202 = scmp.ne.s32.totalorder %s193, %s194
    %p203 = scmp.eq.s32.totalorder %s19, 0
    %p204 = por %p202, %p203
    %p205 = scmp.ne.s32.totalorder %s193, %s194
    %p206 = scmp.eq.s32.totalorder %s20, 3
    %p207 = por %p205, %p206
    %p209 = scmp.ne.s32.totalorder %s194, %s208
    %p210 = scmp.eq.s32.totalorder %s20, 0
    %p211 = por %p209, %p210
    %s212 = ssub.s32 %s21, %s33
    %s213 = ssub.s32 %s22, %s29
    %s214 = sor.u32 %s212, %s213
    %p215 = scmp.eq.s32.totalorder %s214, 0
    %s217 = sadd.s32 %s216, 1
    %s218 = scalar_select %p215, %s216, %s217
    %p221 = pneg %p215
    %p222 = scmp.eq.s32.totalorder %s14, 3
    %p223 = por %p221, %p222
    %p224 = scmp.ne.s32.totalorder %s216, %s219
    %p225 = scmp.eq.s32.totalorder %s14, 0
    %p226 = por %p224, %p225
    %p227 = scmp.ne.s32.totalorder %s216, %s219
    %p228 = scmp.eq.s32.totalorder %s19, 3
    %p229 = por %p227, %p228
    %p230 = scmp.ne.s32.totalorder %s219, %s220
    %p231 = scmp.eq.s32.totalorder %s19, 0
    %p232 = por %p230, %p231
    %p233 = scmp.ne.s32.totalorder %s219, %s220
    %p234 = scmp.eq.s32.totalorder %s20, 3
    %p235 = por %p233, %p234
    %p237 = scmp.ne.s32.totalorder %s220, %s236
    %p238 = scmp.eq.s32.totalorder %s20, 0
    %p239 = por %p237, %p238
    %p240 = scmp.le.s32.totalorder 1, %s14
    %p241 = scmp.lt.s32.totalorder %s14, 5
    %p242 = pnand %p240, %p241
    %p243 = pneg %p242
    // Predicated region
    $region9: #{ternaus_up_forward.1} parent=5 // pred_check
      _
    $region10: #{ternaus_up_forward.1} parent=5 // pred_check_branch
      %245 = sbr.rel (%p242) target = $region12
    $region11: #{ternaus_up_forward.1} parent=5 // pred_region
      %s246 = ssub.s32 %s14, 1
      // Predicated region
      $region13: #{ternaus_up_forward.1} parent=11 // pred_check
        %p247 = pneg %p99
      $region14: #{ternaus_up_forward.1} parent=11 // pred_check_branch
        %249 = sbr.rel (%p247) target = $region16
      $region15: #{ternaus_up_forward.1} parent=11 // pred_region
        _
      $region16: #{ternaus_up_forward.1} parent=11 // pred_fallthru
        _
      // Predicated region
      $region17: #{ternaus_up_forward.1} parent=11 // pred_check
        %p250 = pneg %p120
      $region18: #{ternaus_up_forward.1} parent=11 // pred_check_branch
        %252 = sbr.rel (%p250) target = $region20
      $region19: #{ternaus_up_forward.1} parent=11 // pred_region
        _
      $region20: #{ternaus_up_forward.1} parent=11 // pred_fallthru
        _
      // Predicated region
      $region21: #{ternaus_up_forward.1} parent=11 // pred_check
        %p253 = pneg %p141
      $region22: #{ternaus_up_forward.1} parent=11 // pred_check_branch
        %255 = sbr.rel (%p253) target = $region24
      $region23: #{ternaus_up_forward.1} parent=11 // pred_region
        _
      $region24: #{ternaus_up_forward.1} parent=11 // pred_fallthru
        _
      // Predicated region
      $region25: #{ternaus_up_forward.1} parent=11 // pred_check
        %p256 = pneg %p162
      $region26: #{ternaus_up_forward.1} parent=11 // pred_check_branch
        %258 = sbr.rel (%p256) target = $region28
      $region27: #{ternaus_up_forward.1} parent=11 // pred_region
        _
      $region28: #{ternaus_up_forward.1} parent=11 // pred_fallthru
        _
      // Predicated region
      $region29: #{ternaus_up_forward.1} parent=11 // pred_check
        %p259 = pneg %p183
      $region30: #{ternaus_up_forward.1} parent=11 // pred_check_branch
        %261 = sbr.rel (%p259) target = $region32
      $region31: #{ternaus_up_forward.1} parent=11 // pred_region
        _
      $region32: #{ternaus_up_forward.1} parent=11 // pred_fallthru
        _
      // Predicated region
      $region33: #{ternaus_up_forward.1} parent=11 // pred_check
        %p262 = pneg %p204
      $region34: #{ternaus_up_forward.1} parent=11 // pred_check_branch
        %264 = sbr.rel (%p262) target = $region36
      $region35: #{ternaus_up_forward.1} parent=11 // pred_region
        _
      $region36: #{ternaus_up_forward.1} parent=11 // pred_fallthru
        _
    $region12: #{ternaus_up_forward.1} parent=5 // pred_fallthru
      _
    %p265 = scmp.lt.s32.totalorder %s14, 4
    // Predicated region
    $region37: #{ternaus_up_forward.1} parent=5 // pred_check
      %p266 = pneg %p265
    $region38: #{ternaus_up_forward.1} parent=5 // pred_check_branch
      %268 = sbr.rel (%p266) target = $region40
    $region39: #{ternaus_up_forward.1} parent=5 // pred_region
      // Predicated region
      $region41: #{ternaus_up_forward.1} parent=39 // pred_check
        %p269 = pneg %p46
      $region42: #{ternaus_up_forward.1} parent=39 // pred_check_branch
        %271 = sbr.rel (%p269) target = $region44
      $region43: #{ternaus_up_forward.1} parent=39 // pred_region
        %p272 = scmp.lt.s32.totalorder %s21, 1
        %s273 = scalar_select %p272, %s21, 1
        %s274 = smul.addr %s273, 2
        %s275 = smul.addr %s274, 8
        %s276 = scalar_lea.vmem %s0, %s275
      $region44: #{ternaus_up_forward.1} parent=39 // pred_fallthru
        _
      // Predicated region
      $region45: #{ternaus_up_forward.1} parent=39 // pred_check
        %p277 = pneg %p72
      $region46: #{ternaus_up_forward.1} parent=39 // pred_check_branch
        %279 = sbr.rel (%p277) target = $region48
      $region47: #{ternaus_up_forward.1} parent=39 // pred_region
        %p280 = scmp.lt.s32.totalorder %s21, 1
        %s281 = scalar_select %p280, %s21, 1
        %s282 = smul.addr %s281, 3
        %s283 = smul.addr %s282, 8
        %s284 = scalar_lea.vmem %s1, %s283
      $region48: #{ternaus_up_forward.1} parent=39 // pred_fallthru
        _
    $region40: #{ternaus_up_forward.1} parent=5 // pred_fallthru
      _
    %p285 = scmp.le.s32.totalorder 1, %s14
    %p286 = scmp.lt.s32.totalorder %s14, 5
    %p287 = pnand %p285, %p286
    %p288 = pneg %p287
    // Predicated region
    $region49: #{ternaus_up_forward.1} parent=5 // pred_check
      _
    $region50: #{ternaus_up_forward.1} parent=5 // pred_check_branch
      %290 = sbr.rel (%p287) target = $region52
    $region51: #{ternaus_up_forward.1} parent=5 // pred_region
      %s291 = ssub.s32 %s14, 1
      %p292 = scmp.lt.s32.totalorder %s23, 1
      %s293 = scalar_select %p292, %s23, 1
      %s294 = smul.addr %s293, 2
      %s295 = smul.addr %s294, 8
      %s296 = scalar_lea.vmem %s0, %s295
      %p297 = pneg %p52
      %p298 = pneg %p49
      %p299 = scmp.lt.s32.totalorder %s23, 1
      %s300 = scalar_select %p299, %s23, 1
      %s301 = smul.addr %s300, 3
      %s302 = smul.addr %s301, 8
      %s303 = scalar_lea.vmem %s1, %s302
      %p304 = pneg %p78
      %p305 = pneg %p75
      %p306 = pneg %p99
      %p307 = pneg %p96
      %p308 = pneg %p120
      %p309 = pneg %p117
      %p310 = pneg %p141
      %p311 = pneg %p138
      %p312 = pneg %p162
      %p313 = pneg %p159
      %p314 = pneg %p183
      %p315 = pneg %p180
      %p316 = pneg %p204
      %p317 = pneg %p201
      %p318 = pneg %p232
      %p319 = pneg %p229
      %p320 = scmp.lt.s32.totalorder %s23, 1
      %s321 = scalar_select %p320, %s23, 1
      %p322 = scmp.lt.s32.totalorder %s24, 1
      %s323 = scalar_select %p322, %s24, 1
      %s324 = smul.addr %s321, 2
      %s325 = sadd.s32 %s323, %s324
      %s326 = smul.addr %s325, 8
      %s327 = scalar_lea.vmem %s8, %s326
      %p328 = scmp.lt.s32.totalorder %s23, 1
      %s329 = scalar_select %p328, %s23, 1
      %s330 = smul.addr %s329, 2
      %s331 = smul.addr %s330, 8
      %s332 = scalar_lea.vmem %s0, %s331
      %p333 = scmp.lt.s32.totalorder %s23, 1
      %s334 = scalar_select %p333, %s23, 1
      %s335 = smul.addr %s334, 3
      %s336 = smul.addr %s335, 8
      %s337 = scalar_lea.vmem %s1, %s336
      %p338 = scmp.lt.s32.totalorder %s23, 1
      %s339 = scalar_select %p338, %s23, 1
      %p340 = scmp.lt.s32.totalorder %s24, 1
      %s341 = scalar_select %p340, %s24, 1
      %s342 = smul.addr %s339, 2
      %s343 = sadd.s32 %s341, %s342
      %s344 = smul.addr %s343, 8
      %s345 = scalar_lea.vmem %s8, %s344
      %s346 = smul.u32 %s24, 4
      %s347 = smul.u32 %s24, 8
      %s348 = scalar_lea.vmem %s332, %s346
      %v349 = vld [vmem:[%s348] sm:$0x1f]
      %s350 = sadd.s32 %s346, 1
      %s351 = scalar_lea.vmem %s332, %s350
      %v352 = vld [vmem:[%s351] sm:$0x1f]
      %354 = vrot.lane.b32.xlu0 %v352, 72
      %v355 = vpop.permute.xlu0 %354
      %vm357 = vcmask 588800
      %v358 = vsel %vm357, %v349, %v355
      %v359 = vld [vmem:[%s2] sm:$0xff]
      %v360 = vld [vmem:[%s2 + $0x8] sm:$0xff]
      %v361 = vld [vmem:[%s2 + $0x10] sm:$0xff]
      %v362 = vld [vmem:[%s2 + $0x18] sm:$0xff]
      %v363 = vld [vmem:[%s2 + $0x20] sm:$0xff]
      %v364 = vld [vmem:[%s2 + $0x28] sm:$0xff]
      %v365 = vld [vmem:[%s2 + $0x30] sm:$0xff]
      %v366 = vld [vmem:[%s2 + $0x38] sm:$0xff]
      %v367 = vld [vmem:[%s2 + $0x40] sm:$0xff]
      %v368 = vld [vmem:[%s4] sm:$0x1]
      %v370 = vperm.slane %v368, 0
      %v372 = vsel %vm357, %v352, 0
      %374 = vmatpush.msra.mxu0 0.0
      %375 = vmatpush.msra.mxu0 0.0
      %376 = vmatpush.msra.mxu0 0.0
      %377 = vmatpush.msra.mxu0 0.0
      %378 = vmatpush.msra.mxu0 0.0
      %379 = vmatpush.msra.mxu0 0.0
      %380 = vmatpush.msra.mxu0 0.0
      %381 = vmatpush.msra.mxu0 %v367
      %382 = vmatpush.msra.mxu0 %v366
      %383 = vmatpush.msra.mxu0 %v365
      %384 = vmatpush.msra.mxu0 %v364
      %385 = vmatpush.msra.mxu0 %v363
      %386 = vmatpush.msra.mxu0 %v362
      %387 = vmatpush.msra.mxu0 %v361
      %388 = vmatpush.msra.mxu0 %v360
      %389 = vmatpush.msra.mxu0 %v359
      %390 = vmatmul.f32.gmra.mxu0 %v372
      %v391 = vpop.f32.mrf.mxu0
      %v392 = vadd.f32 %v370, %v391
      %393 = vdwg.mxu0
      %v394 = vld [vmem:[%s3] sm:$0xff]
      %v395 = vld [vmem:[%s3 + $0x8] sm:$0xff]
      %v396 = vld [vmem:[%s3 + $0x10] sm:$0xff]
      %v397 = vld [vmem:[%s3 + $0x18] sm:$0xff]
      %v398 = vld [vmem:[%s3 + $0x20] sm:$0xff]
      %v399 = vld [vmem:[%s3 + $0x28] sm:$0xff]
      %v400 = vld [vmem:[%s3 + $0x30] sm:$0xff]
      %v401 = vld [vmem:[%s3 + $0x38] sm:$0xff]
      %v402 = vld [vmem:[%s3 + $0x40] sm:$0xff]
      %v403 = vld [vmem:[%s3 + $0x48] sm:$0xff]
      %v404 = vld [vmem:[%s3 + $0x50] sm:$0xff]
      %v405 = vld [vmem:[%s3 + $0x58] sm:$0xff]
      %v406 = vld [vmem:[%s3 + $0x60] sm:$0xff]
      %v407 = vld [vmem:[%s3 + $0x68] sm:$0xff]
      %v408 = vld [vmem:[%s3 + $0x70] sm:$0xff]
      %v409 = vld [vmem:[%s3 + $0x78] sm:$0xff]
      %v410 = vld [vmem:[%s3 + $0x80] sm:$0xff]
      %v411 = vld [vmem:[%s3 + $0x88] sm:$0xff]
      %vm412 = vcmask 130048
      %v413 = vsel %vm412, %v355, 0
      %415 = vmatpush.msra.mxu0 %v409
      %416 = vmatpush.msra.mxu0 %v408
      %417 = vmatpush.msra.mxu0 %v407
      %418 = vmatpush.msra.mxu0 %v406
      %419 = vmatpush.msra.mxu0 %v405
      %420 = vmatpush.msra.mxu0 %v404
      %421 = vmatpush.msra.mxu0 %v403
      %422 = vmatpush.msra.mxu0 %v402
      %423 = vmatpush.msra.mxu0 %v401
      %424 = vmatpush.msra.mxu0 %v400
      %425 = vmatpush.msra.mxu0 %v399
      %426 = vmatpush.msra.mxu0 %v398
      %427 = vmatpush.msra.mxu0 %v397
      %428 = vmatpush.msra.mxu0 %v396
      %429 = vmatpush.msra.mxu0 %v395
      %430 = vmatpush.msra.mxu0 %v394
      %431 = vmatmul.f32.gmra.mxu0 %v358
      %v432 = vpop.f32.mrf.mxu0
      %v433 = vadd.f32 %v370, %v432
      %434 = vdwg.mxu0
      %435 = vmatpush.msra.mxu0 0.0
      %436 = vmatpush.msra.mxu0 0.0
      %437 = vmatpush.msra.mxu0 0.0
      %438 = vmatpush.msra.mxu0 0.0
      %439 = vmatpush.msra.mxu0 0.0
      %440 = vmatpush.msra.mxu0 0.0
      %441 = vmatpush.msra.mxu0 0.0
      %442 = vmatpush.msra.mxu0 0.0
      %443 = vmatpush.msra.mxu0 0.0
      %444 = vmatpush.msra.mxu0 0.0
      %445 = vmatpush.msra.mxu0 0.0
      %446 = vmatpush.msra.mxu0 0.0
      %447 = vmatpush.msra.mxu0 0.0
      %448 = vmatpush.msra.mxu0 0.0
      %449 = vmatpush.msra.mxu0 %v411
      %450 = vmatpush.msra.mxu0 %v410
      %451 = vmatmul.f32.gmra.mxu0 %v413
      %v452 = vpop.f32.mrf.mxu0
      %v453 = vadd.f32 %v433, %v452
      %454 = vdwg.mxu0
      %v455 = vmax.f32 %v392, 0.0
      %v456 = vmax.f32 %v453, 0.0
      %v458 = vrot.slane %v456, 1
      %v459 = vrot.slane %v456, 2
      %v460 = vrot.slane %v456, 3
      %v461 = vrot.slane %v456, 4
      %v467 = vrot.slane %v455, 1
      %v468 = vrot.slane %v455, 2
      %v469 = vrot.slane %v455, 3
      %v470 = vrot.slane %v455, 4
      %v471 = vperm.slane %v455, 0
      %v472 = vperm.slane %v467, 0
      %v473 = vperm.slane %v468, 0
      %v474 = vperm.slane %v469, 0
      %v475 = vperm.slane %v470, 0
      %vm481 = vcmask 1040384
      %v482 = vsel %vm481, %v456, %v471
      %v483 = vsel %vm481, %v458, %v472
      %v484 = vsel %vm481, %v459, %v473
      %v485 = vsel %vm481, %v460, %v474
      %v486 = vsel %vm481, %v461, %v475
      %492 = vst [vmem:[#allocation1] ss:$4 sm:$0xff] %v482
      %s493 = scalar_lea.vmem [#allocation1], 1
      %494 = vst [vmem:[%s493] ss:$4 sm:$0xff] %v483
      %s495 = scalar_lea.vmem [#allocation1], 2
      %496 = vst [vmem:[%s495] ss:$4 sm:$0xff] %v484
      %s497 = scalar_lea.vmem [#allocation1], 3
      %498 = vst [vmem:[%s497] ss:$4 sm:$0xff] %v485
      %s499 = scalar_lea.vmem [#allocation1], 32
      %500 = vst [vmem:[%s499] ss:$4 sm:$0xff] %v486
      %v501 = vld.sshfl [vmem:[#allocation1] sm:$0xff pattern:$0x73625140]
      %v502 = vld.sshfl [vmem:[#allocation1 + $0x20] sm:$0xff pattern:$0x73625140]
      %503 = vrot.lane.b32.xlu0 %v501, 4
      %v504 = vpop.permute.xlu0 %503
      %505 = vrot.lane.b32.xlu0 %v502, 4
      %v506 = vpop.permute.xlu0 %505
      %vm509 = vcmask 31744
      %v510 = vsel %vm509, 0.0, %v504
      %v511 = vsel %vm509, 0.0, %v506
      %vm512 = vcmask 556032
      %v513 = vsel %vm512, %v510, 0.0
      %v514 = vsel %vm512, %v511, 0.0
      %v515 = vlaneseq
      %v516 = vshrl.u32 %v515, 7
      %v517 = vadd.s32 %v516, 8
      %s518 = ssub.s32 %s347, 1
      %v519 = vstv %s518
      %v520 = vadd.s32 %v519, %v516
      %v521 = vadd.s32 %v519, %v517
      %vm522 = vcmp.ge.s32.totalorder %v520, 0
      %vm523 = vcmp.ge.s32.totalorder %v521, 0
      %vm524 = vcmp.lt.s32.totalorder %v520, 16
      %vm525 = vcmp.lt.s32.totalorder %v521, 16
      %vm526 = vmand %vm522, %vm524
      %vm527 = vmand %vm523, %vm525
      %v528 = vsel %vm526, 1, 0
      %v529 = vsel %vm527, 1, 0
      %vm530 = vcmp.eq.s32.totalorder %v528, 1
      %vm531 = vcmp.eq.s32.totalorder %v529, 1
      %v532 = vsel %vm530, %v513, 0.0
      %v533 = vsel %vm531, %v514, 0.0
      %vm536 = vcmask 1046528
      %v537 = vrot.slane %v532, 1
      %v538 = vrot.slane %v533, 1
      %v539 = vsel %vm536, %v537, %v538
      %540 = vrot.lane.b32.xlu0 %v539, 72
      %v541 = vpop.permute.xlu0 %540
      %vm543 = vcmask 1045504
      %v544 = vrot.slane %v532, 2
      %v545 = vrot.slane %v533, 2
      %v546 = vsel %vm543, %v544, %v545
      %547 = vrot.lane.b32.xlu0 %v546, 16
      %v548 = vpop.permute.xlu0 %547
      %v550 = vsel %vm357, %v532, %v541
      %v551 = vsel %vm412, %v541, %v548
      %s552 = scalar_lea.vmem %s337, %s347
      %v553 = vld [vmem:[%s552] sm:$0xff]
      %s554 = sadd.s32 %s347, 1
      %s555 = scalar_lea.vmem %s337, %s554
      %v556 = vld [vmem:[%s555] sm:$0xff]
      %s557 = sadd.s32 %s347, 2
      %s558 = scalar_lea.vmem %s337, %s557
      %v559 = vld [vmem:[%s558] sm:$0xff]
      %561 = vrot.lane.b32.xlu0 %v556, 72
      %v562 = vpop.permute.xlu0 %561
      %565 = vrot.lane.b32.xlu0 %v559, 16
      %v566 = vpop.permute.xlu0 %565
      %v568 = vsel %vm357, %v553, %v562
      %v569 = vsel %vm412, %v562, %v566
      %v570 = vld [vmem:[%s5] sm:$0xff]
      %v571 = vld [vmem:[%s5 + $0x8] sm:$0xff]
      %v572 = vld [vmem:[%s5 + $0x10] sm:$0xff]
      %v573 = vld [vmem:[%s5 + $0x18] sm:$0xff]
      %v574 = vld [vmem:[%s5 + $0x20] sm:$0xff]
      %v575 = vld [vmem:[%s5 + $0x28] sm:$0xff]
      %v576 = vld [vmem:[%s5 + $0x30] sm:$0xff]
      %v577 = vld [vmem:[%s5 + $0x38] sm:$0xff]
      %v578 = vld [vmem:[%s5 + $0x40] sm:$0xff]
      %v579 = vld [vmem:[%s5 + $0x48] sm:$0xff]
      %v580 = vld [vmem:[%s5 + $0x50] sm:$0xff]
      %v581 = vld [vmem:[%s5 + $0x58] sm:$0xff]
      %v582 = vld [vmem:[%s5 + $0x60] sm:$0xff]
      %v583 = vld [vmem:[%s5 + $0x68] sm:$0xff]
      %v584 = vld [vmem:[%s5 + $0x70] sm:$0xff]
      %v585 = vld [vmem:[%s5 + $0x78] sm:$0xff]
      %v586 = vld [vmem:[%s5 + $0x80] sm:$0xff]
      %v587 = vld [vmem:[%s5 + $0x88] sm:$0xff]
      %v588 = vld [vmem:[%s5 + $0x90] sm:$0xff]
      %v589 = vld [vmem:[%s5 + $0x98] sm:$0xff]
      %v590 = vld [vmem:[%s5 + $0xa0] sm:$0xff]
      %v591 = vld [vmem:[%s5 + $0xa8] sm:$0xff]
      %v592 = vld [vmem:[%s5 + $0xb0] sm:$0xff]
      %v593 = vld [vmem:[%s5 + $0xb8] sm:$0xff]
      %v594 = vld [vmem:[%s5 + $0xc0] sm:$0xff]
      %v595 = vld [vmem:[%s5 + $0xc8] sm:$0xff]
      %v596 = vld [vmem:[%s5 + $0xd0] sm:$0xff]
      %v597 = vld [vmem:[%s6] sm:$0xff]
      %v598 = vld [vmem:[%s6 + $0x8] sm:$0xff]
      %v599 = vld [vmem:[%s6 + $0x10] sm:$0xff]
      %v600 = vld [vmem:[%s6 + $0x18] sm:$0xff]
      %v601 = vld [vmem:[%s6 + $0x20] sm:$0xff]
      %v602 = vld [vmem:[%s6 + $0x28] sm:$0xff]
      %v603 = vld [vmem:[%s6 + $0x30] sm:$0xff]
      %v604 = vld [vmem:[%s6 + $0x38] sm:$0xff]
      %v605 = vld [vmem:[%s6 + $0x40] sm:$0xff]
      %v606 = vld [vmem:[%s6 + $0x48] sm:$0xff]
      %v607 = vld [vmem:[%s6 + $0x50] sm:$0xff]
      %v608 = vld [vmem:[%s6 + $0x58] sm:$0xff]
      %v609 = vld [vmem:[%s6 + $0x60] sm:$0xff]
      %v610 = vld [vmem:[%s6 + $0x68] sm:$0xff]
      %v611 = vld [vmem:[%s6 + $0x70] sm:$0xff]
      %v612 = vld [vmem:[%s6 + $0x78] sm:$0xff]
      %v613 = vld [vmem:[%s6 + $0x80] sm:$0xff]
      %v614 = vld [vmem:[%s6 + $0x88] sm:$0xff]
      %v615 = vld [vmem:[%s6 + $0x90] sm:$0xff]
      %v616 = vld [vmem:[%s6 + $0x98] sm:$0xff]
      %v617 = vld [vmem:[%s6 + $0xa0] sm:$0xff]
      %v618 = vld [vmem:[%s6 + $0xa8] sm:$0xff]
      %v619 = vld [vmem:[%s6 + $0xb0] sm:$0xff]
      %v620 = vld [vmem:[%s6 + $0xb8] sm:$0xff]
      %v621 = vld [vmem:[%s6 + $0xc0] sm:$0xff]
      %v622 = vld [vmem:[%s6 + $0xc8] sm:$0xff]
      %v623 = vld [vmem:[%s6 + $0xd0] sm:$0xff]
      %vm624 = vcmask 719872
      %v626 = vsel %vm624, %v569, 0
      %628 = vmatpush.msra.mxu0 %v612
      %629 = vmatpush.msra.mxu0 %v611
      %630 = vmatpush.msra.mxu0 %v610
      %631 = vmatpush.msra.mxu0 %v609
      %632 = vmatpush.msra.mxu0 %v608
      %633 = vmatpush.msra.mxu0 %v607
      %634 = vmatpush.msra.mxu0 %v606
      %635 = vmatpush.msra.mxu0 %v605
      %636 = vmatpush.msra.mxu0 %v604
      %637 = vmatpush.msra.mxu0 %v603
      %638 = vmatpush.msra.mxu0 %v602
      %639 = vmatpush.msra.mxu0 %v601
      %640 = vmatpush.msra.mxu0 %v600
      %641 = vmatpush.msra.mxu0 %v599
      %642 = vmatpush.msra.mxu0 %v598
      %643 = vmatpush.msra.mxu0 %v597
      %644 = vmatmul.f32.gmra.mxu0 %v568
      %v645 = vpop.f32.mrf.mxu0
      %v646 = vadd.f32 0.0, %v645
      %647 = vdwg.mxu0
      %648 = vmatpush.msra.mxu0 0.0
      %649 = vmatpush.msra.mxu0 0.0
      %650 = vmatpush.msra.mxu0 0.0
      %651 = vmatpush.msra.mxu0 0.0
      %652 = vmatpush.msra.mxu0 0.0
      %653 = vmatpush.msra.mxu0 %v623
      %654 = vmatpush.msra.mxu0 %v622
      %655 = vmatpush.msra.mxu0 %v621
      %656 = vmatpush.msra.mxu0 %v620
      %657 = vmatpush.msra.mxu0 %v619
      %658 = vmatpush.msra.mxu0 %v618
      %659 = vmatpush.msra.mxu0 %v617
      %660 = vmatpush.msra.mxu0 %v616
      %661 = vmatpush.msra.mxu0 %v615
      %662 = vmatpush.msra.mxu0 %v614
      %663 = vmatpush.msra.mxu0 %v613
      %664 = vmatmul.f32.gmra.mxu0 %v626
      %v665 = vpop.f32.mrf.mxu0
      %v666 = vadd.f32 %v646, %v665
      %667 = vdwg.mxu0
      %v669 = vsel %vm624, %v551, 0
      %671 = vmatpush.msra.mxu0 %v585
      %672 = vmatpush.msra.mxu0 %v584
      %673 = vmatpush.msra.mxu0 %v583
      %674 = vmatpush.msra.mxu0 %v582
      %675 = vmatpush.msra.mxu0 %v581
      %676 = vmatpush.msra.mxu0 %v580
      %677 = vmatpush.msra.mxu0 %v579
      %678 = vmatpush.msra.mxu0 %v578
      %679 = vmatpush.msra.mxu0 %v577
      %680 = vmatpush.msra.mxu0 %v576
      %681 = vmatpush.msra.mxu0 %v575
      %682 = vmatpush.msra.mxu0 %v574
      %683 = vmatpush.msra.mxu0 %v573
      %684 = vmatpush.msra.mxu0 %v572
      %685 = vmatpush.msra.mxu0 %v571
      %686 = vmatpush.msra.mxu0 %v570
      %687 = vmatmul.f32.gmra.mxu0 %v550
      %v688 = vpop.f32.mrf.mxu0
      %v689 = vadd.f32 %v666, %v688
      %690 = vdwg.mxu0
      %691 = vmatpush.msra.mxu0 0.0
      %692 = vmatpush.msra.mxu0 0.0
      %693 = vmatpush.msra.mxu0 0.0
      %694 = vmatpush.msra.mxu0 0.0
      %695 = vmatpush.msra.mxu0 0.0
      %696 = vmatpush.msra.mxu0 %v596
      %697 = vmatpush.msra.mxu0 %v595
      %698 = vmatpush.msra.mxu0 %v594
      %699 = vmatpush.msra.mxu0 %v593
      %700 = vmatpush.msra.mxu0 %v592
      %701 = vmatpush.msra.mxu0 %v591
      %702 = vmatpush.msra.mxu0 %v590
      %703 = vmatpush.msra.mxu0 %v589
      %704 = vmatpush.msra.mxu0 %v588
      %705 = vmatpush.msra.mxu0 %v587
      %706 = vmatpush.msra.mxu0 %v586
      %707 = vmatmul.f32.gmra.mxu0 %v669
      %v708 = vpop.f32.mrf.mxu0
      %v709 = vadd.f32 %v689, %v708
      %710 = vdwg.mxu0
      %v711 = vld [vmem:[%s7] sm:$0x1]
      %v713 = vperm.slane %v711, 0
      %v715 = vadd.f32 %v709, %v713
      %v716 = vmax.f32 %v715, 0.0
      %717 = vst [vmem:[%s345] sm:$0xff] %v716
      %p718 = scmp.lt.s32.totalorder %s23, 1
      %s719 = scalar_select %p718, %s23, 1
      %p720 = scmp.lt.s32.totalorder %s24, 1
      %s721 = scalar_select %p720, %s24, 1
      %s722 = smul.addr %s719, 2
      %s723 = sadd.s32 %s721, %s722
      %s724 = smul.addr %s723, 8
      %s725 = scalar_lea.vmem %s8, %s724
      // Predicated region
      $region53: #{ternaus_up_forward.1} parent=51 // pred_check
        %p726 = pneg %p229
      $region54: #{ternaus_up_forward.1} parent=51 // pred_check_branch
        %728 = sbr.rel (%p726) target = $region56
      $region55: #{ternaus_up_forward.1} parent=51 // pred_region
        _
      $region56: #{ternaus_up_forward.1} parent=51 // pred_fallthru
        _
    $region52: #{ternaus_up_forward.1} parent=5 // pred_fallthru
      _
    %p729 = scmp.le.s32.totalorder 2, %s14
    // Predicated region
    $region57: #{ternaus_up_forward.1} parent=5 // pred_check
      %p730 = pneg %p729
    $region58: #{ternaus_up_forward.1} parent=5 // pred_check_branch
      %732 = sbr.rel (%p730) target = $region60
    $region59: #{ternaus_up_forward.1} parent=5 // pred_region
      %s733 = ssub.s32 %s14, 2
      // Predicated region
      $region61: #{ternaus_up_forward.1} parent=59 // pred_check
        %p734 = pneg %p235
      $region62: #{ternaus_up_forward.1} parent=59 // pred_check_branch
        %736 = sbr.rel (%p734) target = $region64
      $region63: #{ternaus_up_forward.1} parent=59 // pred_region
        %p737 = scmp.lt.s32.totalorder %s25, 1
        %s738 = scalar_select %p737, %s25, 1
        %p739 = scmp.lt.s32.totalorder %s26, 1
        %s740 = scalar_select %p739, %s26, 1
        %s741 = smul.addr %s738, 2
        %s742 = sadd.s32 %s740, %s741
        %s743 = smul.addr %s742, 8
        %s744 = scalar_lea.vmem %s8, %s743
      $region64: #{ternaus_up_forward.1} parent=59 // pred_fallthru
        _
    $region60: #{ternaus_up_forward.1} parent=5 // pred_fallthru
      _
  $region6: #{ternaus_up_forward.1} parent=0 // loop_footer
    %s18 = sadd.s32 1, %s14
  $region7: #{ternaus_up_forward.1} parent=0 // loop_footer_branch
    %13 = sbr.rel target = $region3
  $region8: #{ternaus_up_forward.1} parent=0 // loop_exit
    _

</llo_original>
